<compile_context>
chip_gen: v6e
topology: v6e:2x2x1
jax: 0.10.0
libtpu: 0.0.40
codegen_flags: <defaults>
</compile_context>

<pallas_src>
import jax
import jax.numpy as jnp
from jax.experimental import pallas as pl
from jax.experimental.pallas import tpu as pltpu


def _round_up(x, m):
    return ((x + m - 1) // m) * m


# -----------------------------------------------------------------------------
# Kernel: fused 2-layer MLP block, split-input form.
#   s_ref  : (tm, Ds)   flattened state rows
#   a_ref  : (tm, A)    action rows
#   w1s_ref: (Ds, Hp)   state rows of W1 (lane-padded to Hp)
#   w1a_ref: (A,  Hp)   action rows of W1
#   b1_ref : (1,  Hp)   b1 (+ constant-1 spare lane at index H for b2)
#   w2_ref : (1,  Hp)   w2 row (+ b2 on the spare lane)
#   out_ref: (tm, 1)
# -----------------------------------------------------------------------------
def critic_kernel(s_ref, a_ref, w1s_ref, w1a_ref, b1_ref, w2_ref, out_ref):
    h = jnp.dot(s_ref[...], w1s_ref[...], preferred_element_type=jnp.float32)
    h = h + jnp.dot(a_ref[...], w1a_ref[...], preferred_element_type=jnp.float32)
    h = jnp.maximum(h + b1_ref[...], 0.0)  # ReLU; pad lanes stay 0, bias lane -> 1
    # Layer 2: VPU multiply + XLU lane reduce (b2 comes in via the spare lane).
    out_ref[...] = jnp.sum(h * w2_ref[...], axis=-1, keepdims=True)


# -----------------------------------------------------------------------------
# Parameters
# -----------------------------------------------------------------------------
def init_params(key, state_size, num_objects, action_size, hidden_dim):
    """PyTorch-Linear-like uniform init. Weights stored as (in, out)."""
    d_in = state_size * num_objects + action_size
    k1, k2, k3, k4 = jax.random.split(key, 4)
    lim1 = 1.0 / jnp.sqrt(jnp.float32(d_in))
    lim2 = 1.0 / jnp.sqrt(jnp.float32(hidden_dim))
    w1 = jax.random.uniform(k1, (d_in, hidden_dim), jnp.float32, -lim1, lim1)
    b1 = jax.random.uniform(k2, (hidden_dim,), jnp.float32, -lim1, lim1)
    w2 = jax.random.uniform(k3, (hidden_dim,), jnp.float32, -lim2, lim2)
    b2 = jax.random.uniform(k4, (), jnp.float32, -lim2, lim2)
    return w1, b1, w2, b2


def pack_params(w1, b1, w2, b2, state_dim):
    """Split W1 row-wise (state block / action block), lane-pad H, fold b2.

      w1s[:, :H] = w1[:state_dim]     w1a[:, :H] = w1[state_dim:]
      b1p[0, :H] = b1, b1p[0, H] = 1  w2p[0, :H] = w2, w2p[0, H] = b2
    so that sum(relu(s@w1s + a@w1a + b1p) * w2p) == relu(x@w1 + b1)@w2 + b2,
    since the spare hidden lane H evaluates to relu(0 + 0 + 1) = 1 and all
    other pad lanes are exact zeros through ReLU and the reduce.
    """
    D, H = w1.shape
    Hp = _round_up(H + 1, 128)    # lane-dense hidden width, spare lane -> b2
    w1s = jnp.zeros((state_dim, Hp), jnp.float32).at[:, :H].set(w1[:state_dim])
    w1a = jnp.zeros((D - state_dim, Hp), jnp.float32).at[:, :H].set(w1[state_dim:])
    b1p = jnp.zeros((1, Hp), jnp.float32).at[0, :H].set(b1).at[0, H].set(1.0)
    w2p = jnp.zeros((1, Hp), jnp.float32).at[0, :H].set(w2).at[0, H].set(b2)
    return {"w1s": w1s, "w1a": w1a, "b1": b1p, "w2": w2p}


# -----------------------------------------------------------------------------
# pallas_call wrapper
# -----------------------------------------------------------------------------
def _pallas_forward(s, a, w1s, w1a, b1, w2, tm):
    Bp = s.shape[0]
    Ds, Hp = w1s.shape
    A = w1a.shape[0]

    if tm is None or tm >= Bp:
        # Small/moderate batch: gridless whole-array VMEM blocks; no pipeline
        # scaffolding, no per-step overhead.
        return pl.pallas_call(
            critic_kernel,
            out_shape=jax.ShapeDtypeStruct((Bp, 1), jnp.float32),
            in_specs=[pl.BlockSpec(memory_space=pltpu.MemorySpace.VMEM)] * 6,
            out_specs=pl.BlockSpec(memory_space=pltpu.MemorySpace.VMEM),
        )(s, a, w1s, w1a, b1, w2)

    # Large batch: big tiles amortize the ~0.35us/step overhead; weights are
    # grid-resident (index_map -> (0, 0)); batch axis is "parallel" so v7x's
    # two TensorCores split the (>= 2) steps.
    return pl.pallas_call(
        critic_kernel,
        out_shape=jax.ShapeDtypeStruct((Bp, 1), jnp.float32),
        grid=(Bp // tm,),
        in_specs=[
            pl.BlockSpec((tm, Ds), lambda i: (i, 0)),   # batch-tiled states
            pl.BlockSpec((tm, A), lambda i: (i, 0)),    # batch-tiled actions
            pl.BlockSpec((Ds, Hp), lambda i: (0, 0)),   # resident weights
            pl.BlockSpec((A, Hp), lambda i: (0, 0)),
            pl.BlockSpec((1, Hp), lambda i: (0, 0)),
            pl.BlockSpec((1, Hp), lambda i: (0, 0)),
        ],
        out_specs=pl.BlockSpec((tm, 1), lambda i: (i, 0)),
        compiler_params=pltpu.CompilerParams(
            dimension_semantics=("parallel",)),
    )(s, a, w1s, w1a, b1, w2)


def critic_forward_batch(states, actions, params,
                         block_max=2048, gridless_max=1024):
    """Batched forward: states (B, num_objects, S), actions (B, A) -> (B,)."""
    B = states.shape[0]
    s = states.reshape(B, -1).astype(jnp.float32)   # no concat/pad: 1x HBM read
    a = actions.astype(jnp.float32)

    if B <= gridless_max:
        tm = None
        Bp = _round_up(max(B, 8), 8)
    else:
        # Tile by step-overhead amortization (sweep block_max 1024-4096);
        # keep >= 2 grid steps so both v7x TensorCores get work.
        n_steps = max(2, pl.cdiv(B, block_max))
        tm = _round_up(pl.cdiv(B, n_steps), 8)
        Bp = _round_up(B, tm)

    if Bp > B:
        s = jnp.concatenate([s, jnp.zeros((Bp - B, s.shape[1]), s.dtype)], 0)
        a = jnp.concatenate([a, jnp.zeros((Bp - B, a.shape[1]), a.dtype)], 0)

    out = _pallas_forward(s, a, params["w1s"], params["w1a"],
                          params["b1"], params["w2"], tm)
    return out[:B, 0]


def critic_forward(state, action, params):
    """Single-sample forward matching the PyTorch module; returns shape (1,)."""
    # Reuse the batched kernel (B=1 padded to 8 rows) instead of a dedicated
    # launch path.
    return critic_forward_batch(state[None], action[None], params)


# -----------------------------------------------------------------------------
if __name__ == "__main__":
    state_size, num_objects, action_size, hidden_dim = 4, 4, 8, 32

    key = jax.random.PRNGKey(0)
    kp, ks, ka, kbs, kba = jax.random.split(key, 5)

    w1, b1, w2, b2 = init_params(kp, state_size, num_objects, action_size,
                                 hidden_dim)
    params = pack_params(w1, b1, w2, b2, state_size * num_objects)

    # --- single sample (exact module semantics: output shape (1,)) ----------
    state = jax.random.normal(ks, (num_objects, state_size), jnp.float32)
    action = jax.random.normal(ka, (action_size,), jnp.float32)
    out1 = jax.block_until_ready(critic_forward(state, action, params))

    x = jnp.concatenate([state.reshape(-1), action])
    ref1 = jnp.maximum(x @ w1 + b1, 0.0) @ w2 + b2
    assert out1.shape == (1,), out1.shape
    assert jnp.allclose(out1[0], ref1, atol=1e-5), (out1, ref1)

    # --- batched, gridless path (B <= gridless_max) --------------------------
    B = 16
    states = jax.random.normal(kbs, (B, num_objects, state_size), jnp.float32)
    actions = jax.random.normal(kba, (B, action_size), jnp.float32)
    outB = jax.block_until_ready(critic_forward_batch(states, actions, params))

    xB = jnp.concatenate([states.reshape(B, -1), actions], axis=-1)
    refB = jnp.maximum(xB @ w1 + b1, 0.0) @ w2 + b2
    assert outB.shape == (B,), outB.shape
    assert jnp.allclose(outB, refB, atol=1e-5), (outB, refB)

    # --- batched, tiled grid path (forced at small shapes: 2 parallel steps) -
    outB2 = jax.block_until_ready(
        critic_forward_batch(states, actions, params, gridless_max=8))
    assert outB2.shape == (B,), outB2.shape
    assert jnp.allclose(outB2, refB, atol=1e-5), (outB2, refB)

    print("KERNEL_OK")
</pallas_src>

<mosaic_0001>
module attributes {stable_mosaic.version = 11 : i64} {
  func.func @critic_kernel(%arg0: memref<8x16xf32, #tpu.memory_space<vmem>>, %arg1: memref<8x8xf32, #tpu.memory_space<vmem>>, %arg2: memref<16x128xf32, #tpu.memory_space<vmem>>, %arg3: memref<8x128xf32, #tpu.memory_space<vmem>>, %arg4: memref<1x128xf32, #tpu.memory_space<vmem>>, %arg5: memref<1x128xf32, #tpu.memory_space<vmem>>, %arg6: memref<8x1xf32, #tpu.memory_space<vmem>>) attributes {dimension_semantics = [], scalar_prefetch = 0 : i64, scratch_operands = 0 : i64, tpu.core_type = #tpu.core_type<tc>} {
    %c0 = arith.constant 0 : index
    %c0_0 = arith.constant 0 : index
    %0 = vector.load %arg0[%c0, %c0_0] : memref<8x16xf32, #tpu.memory_space<vmem>>, vector<8x16xf32>
    %c0_1 = arith.constant 0 : index
    %c0_2 = arith.constant 0 : index
    %1 = vector.load %arg2[%c0_1, %c0_2] : memref<16x128xf32, #tpu.memory_space<vmem>>, vector<16x128xf32>
    %cst = arith.constant dense<0.000000e+00> : vector<8x128xf32>
    %2 = tpu.matmul %0, %1, %cst {dimension_numbers = #tpu.dot_dimension_numbers<[1], [0], [0], [1], [0, 0, 1, 1], [], []>} : vector<8x16xf32>, vector<16x128xf32>, vector<8x128xf32> -> vector<8x128xf32>
    %c0_3 = arith.constant 0 : index
    %c0_4 = arith.constant 0 : index
    %3 = vector.load %arg1[%c0_3, %c0_4] : memref<8x8xf32, #tpu.memory_space<vmem>>, vector<8x8xf32>
    %c0_5 = arith.constant 0 : index
    %c0_6 = arith.constant 0 : index
    %4 = vector.load %arg3[%c0_5, %c0_6] : memref<8x128xf32, #tpu.memory_space<vmem>>, vector<8x128xf32>
    %cst_7 = arith.constant dense<0.000000e+00> : vector<8x128xf32>
    %5 = tpu.matmul %3, %4, %cst_7 {dimension_numbers = #tpu.dot_dimension_numbers<[1], [0], [0], [1], [0, 0, 1, 1], [], []>} : vector<8x8xf32>, vector<8x128xf32>, vector<8x128xf32> -> vector<8x128xf32>
    %6 = arith.addf %2, %5 : vector<8x128xf32>
    %c0_8 = arith.constant 0 : index
    %c0_9 = arith.constant 0 : index
    %7 = vector.load %arg4[%c0_8, %c0_9] : memref<1x128xf32, #tpu.memory_space<vmem>>, vector<1x128xf32>
    %8 = vector.broadcast %7 : vector<1x128xf32> to vector<8x128xf32>
    %9 = arith.addf %6, %8 : vector<8x128xf32>
    %cst_10 = arith.constant 0.000000e+00 : f32
    %10 = vector.broadcast %cst_10 : f32 to vector<8x128xf32>
    %11 = arith.maximumf %9, %10 : vector<8x128xf32>
    %c0_11 = arith.constant 0 : index
    %c0_12 = arith.constant 0 : index
    %12 = vector.load %arg5[%c0_11, %c0_12] : memref<1x128xf32, #tpu.memory_space<vmem>>, vector<1x128xf32>
    %13 = vector.broadcast %12 : vector<1x128xf32> to vector<8x128xf32>
    %14 = arith.mulf %11, %13 : vector<8x128xf32>
    %cst_13 = arith.constant dense<0.000000e+00> : vector<8xf32>
    %15 = vector.multi_reduction <add>, %14, %cst_13 [1] : vector<8x128xf32> to vector<8xf32>
    %16 = vector.shape_cast %15 : vector<8xf32> to vector<8x1xf32>
    %c0_14 = arith.constant 0 : index
    %c0_15 = arith.constant 0 : index
    %17 = vector.load %arg6[%c0_14, %c0_15] : memref<8x1xf32, #tpu.memory_space<vmem>>, vector<8x1xf32>
    tpu.vector_store %arg6[%c0_14, %c0_15], %16 {strides = array<i32>} : memref<8x1xf32, #tpu.memory_space<vmem>>, vector<8x1xf32>,
    return
  }
}

</mosaic_0001>

<llo_original>
// kernel: tpu_custom_call.1
$region0: #{tpu_custom_call.1}
  #allocation0 [shape = 'u32[]', space=smem, size = 0x4, offset = 0x4, fixed_abs, tag = 'smem constant byte address 0x4 - core index']
  #allocation1 [shape = 'u32[144,128]{1,0:T(1,128)}', space=vmem, size = 0x12000, scoped, tag = 'internal scratch']
  %s0 = inlined_call_operand.hbm [shape: f32[8,16], index: 0, kind: input, shape index: {}]
  %s1 = inlined_call_operand.hbm [shape: f32[8,8], index: 1, kind: input, shape index: {}]
  %s2 = inlined_call_operand.hbm [shape: f32[16,128], index: 2, kind: input, shape index: {}]
  %s3 = inlined_call_operand.hbm [shape: f32[8,128], index: 3, kind: input, shape index: {}]
  %s4 = inlined_call_operand.vmem [shape: f32[1,128], index: 4, kind: input, shape index: {}]
  %s5 = inlined_call_operand.vmem [shape: f32[1,128], index: 5, kind: input, shape index: {}]
  %s6 = inlined_call_operand.vmem [shape: f32[8,1], index: 6, kind: output, shape index: {}]
  %s7 = sld [smem:[#allocation0]]
  $region50: #{tpu_custom_call.1} parent=0
    _
  %s9 = ssub.s32 1, %s7
  %s10 = scalar_select 0, %s9, %s7
  $region1: #{tpu_custom_call.1} parent=0
    #allocation2 [shape = 'u8[4096]{0}', space=vmem, size = 0x1000, scoped, tag = 'input window, operand 0, single buffered']
    #allocation3 [shape = 's32[1]{0}', space=sflag, size = 0x4, scoped, tag = 'scoped memory for tpu_custom_call.1']
    #allocation4 [shape = 'u8[4096]{0}', space=vmem, size = 0x1000, scoped, tag = 'input window, operand 1, single buffered']
    #allocation5 [shape = 's32[1]{0}', space=sflag, size = 0x4, scoped, tag = 'scoped memory for tpu_custom_call.1']
    #allocation6 [shape = 'u8[8192]{0}', space=vmem, size = 0x2000, scoped, tag = 'input window, operand 2, single buffered']
    #allocation7 [shape = 'u8[4096]{0}', space=vmem, size = 0x1000, scoped, tag = 'input window, operand 3, single buffered']
    #allocation8 [shape = 's32[1]{0}', space=sflag, size = 0x4, scoped, tag = 'scoped memory for tpu_custom_call.1']
    %11 = vsyncpa [#allocation3], 0
    %12 = vsyncpa [#allocation5], 0
    %13 = vsyncpa [#allocation8], 0
    // Predicated region
    $region2: #{tpu_custom_call.1} parent=1 // pred_check
      _
    $region3: #{tpu_custom_call.1} parent=1 // pred_check_branch
      %15 = sbr.rel (0) target = $region5
    $region4: #{tpu_custom_call.1} parent=1 // pred_region
      %s17 = ssub.s32 128, 128
      %18 = vsyncadd [#allocation3], %s17
      %s20 = sshll.u32 [#allocation2], 4
      %s21 = int_to_ptr.vmem [resolvable:$true] %s20
      %23 = dma.hbm_to_vmem [thread:$0]  %s0, 128, %s21, [#allocation3]
    $region5: #{tpu_custom_call.1} parent=1 // pred_fallthru
      _
    // Predicated region
    $region6: #{tpu_custom_call.1} parent=1 // pred_check
      _
    $region7: #{tpu_custom_call.1} parent=1 // pred_check_branch
      %25 = sbr.rel (0) target = $region9
    $region8: #{tpu_custom_call.1} parent=1 // pred_region
      %s27 = ssub.s32 128, 128
      %28 = vsyncadd [#allocation5], %s27
      %s30 = sshll.u32 [#allocation4], 4
      %s31 = int_to_ptr.vmem [resolvable:$true] %s30
      %33 = dma.hbm_to_vmem [thread:$0]  %s1, 128, %s31, [#allocation5]
    $region9: #{tpu_custom_call.1} parent=1 // pred_fallthru
      _
    // Predicated region
    $region10: #{tpu_custom_call.1} parent=1 // pred_check
      _
    $region11: #{tpu_custom_call.1} parent=1 // pred_check_branch
      %35 = sbr.rel (0) target = $region13
    $region12: #{tpu_custom_call.1} parent=1 // pred_region
      %s37 = ssub.s32 256, 256
      %38 = vsyncadd [#allocation5], %s37
      %s39 = sshll.u32 [#allocation6], 4
      %s40 = int_to_ptr.vmem [resolvable:$true] %s39
      %45 = dma.hbm_to_vmem [thread:$0]  %s2, 256, %s40, [#allocation5], 128, 128, 8
    $region13: #{tpu_custom_call.1} parent=1 // pred_fallthru
      _
    // Predicated region
    $region14: #{tpu_custom_call.1} parent=1 // pred_check
      _
    $region15: #{tpu_custom_call.1} parent=1 // pred_check_branch
      %47 = sbr.rel (0) target = $region17
    $region16: #{tpu_custom_call.1} parent=1 // pred_region
      %s49 = ssub.s32 128, 128
      %50 = vsyncadd [#allocation8], %s49
      %s52 = sshll.u32 [#allocation7], 4
      %s53 = int_to_ptr.vmem [resolvable:$true] %s52
      %55 = dma.hbm_to_vmem [thread:$0]  %s3, 128, %s53, [#allocation8]
    $region17: #{tpu_custom_call.1} parent=1 // pred_fallthru
      _
    // Predicated region
    $region18: #{tpu_custom_call.1} parent=1 // pred_check
      _
    $region19: #{tpu_custom_call.1} parent=1 // pred_check_branch
      %57 = sbr.rel (0) target = $region21
    $region20: #{tpu_custom_call.1} parent=1 // pred_region
      _
    $region21: #{tpu_custom_call.1} parent=1 // pred_fallthru
      _
    // Predicated region
    $region22: #{tpu_custom_call.1} parent=1 // pred_check
      _
    $region23: #{tpu_custom_call.1} parent=1 // pred_check_branch
      %59 = sbr.rel (0) target = $region25
    $region24: #{tpu_custom_call.1} parent=1 // pred_region
      _
    $region25: #{tpu_custom_call.1} parent=1 // pred_fallthru
      _
    // Predicated region
    $region26: #{tpu_custom_call.1} parent=1 // pred_check
      _
    $region27: #{tpu_custom_call.1} parent=1 // pred_check_branch
      %61 = sbr.rel (0) target = $region29
    $region28: #{tpu_custom_call.1} parent=1 // pred_region
      %62 = dma.done [#allocation3], 128
    $region29: #{tpu_custom_call.1} parent=1 // pred_fallthru
      _
    // Predicated region
    $region30: #{tpu_custom_call.1} parent=1 // pred_check
      _
    $region31: #{tpu_custom_call.1} parent=1 // pred_check_branch
      %64 = sbr.rel (0) target = $region33
    $region32: #{tpu_custom_call.1} parent=1 // pred_region
      %65 = dma.done [#allocation5], 128
    $region33: #{tpu_custom_call.1} parent=1 // pred_fallthru
      _
    // Predicated region
    $region34: #{tpu_custom_call.1} parent=1 // pred_check
      _
    $region35: #{tpu_custom_call.1} parent=1 // pred_check_branch
      %67 = sbr.rel (0) target = $region37
    $region36: #{tpu_custom_call.1} parent=1 // pred_region
      %68 = dma.done [#allocation5], 256
    $region37: #{tpu_custom_call.1} parent=1 // pred_fallthru
      _
    // Predicated region
    $region38: #{tpu_custom_call.1} parent=1 // pred_check
      _
    $region39: #{tpu_custom_call.1} parent=1 // pred_check_branch
      %70 = sbr.rel (0) target = $region41
    $region40: #{tpu_custom_call.1} parent=1 // pred_region
      %71 = dma.done [#allocation8], 128
    $region41: #{tpu_custom_call.1} parent=1 // pred_fallthru
      _
    %v72 = vld [vmem:[#allocation2] sm:$0xff]
    %v73 = vld [vmem:[#allocation6] sm:$0xff]
    %v74 = vld [vmem:[#allocation6 + $0x8] sm:$0xff]
    %v75 = vld [vmem:[#allocation4] sm:$0xff]
    %v76 = vld [vmem:[#allocation7] sm:$0xff]
    %vm77 = vcmask 64512
    %v79 = vsel %vm77, %v75, 0
    %81 = vmatprep.subr.mxu0 0.0
    %82 = vmatpush1.msra.mxu0 0.0
    %83 = vmatprep.subr.mxu0 0.0
    %84 = vmatpush1.msra.mxu0 0.0
    %85 = vmatprep.subr.mxu0 0.0
    %86 = vmatpush1.msra.mxu0 0.0
    %87 = vmatprep.subr.mxu0 0.0
    %88 = vmatpush1.msra.mxu0 0.0
    %89 = vmatprep.subr.mxu0 0.0
    %90 = vmatpush1.msra.mxu0 0.0
    %91 = vmatprep.subr.mxu0 0.0
    %92 = vmatpush1.msra.mxu0 0.0
    %93 = vmatprep.subr.mxu0 0.0
    %94 = vmatpush1.msra.mxu0 0.0
    %95 = vmatprep.subr.mxu0 0.0
    %96 = vmatpush1.msra.mxu0 0.0
    %97 = vmatprep.subr.mxu0 0.0
    %98 = vmatpush1.msra.mxu0 0.0
    %99 = vmatprep.subr.mxu0 0.0
    %100 = vmatpush1.msra.mxu0 0.0
    %101 = vmatprep.subr.mxu0 0.0
    %102 = vmatpush1.msra.mxu0 0.0
    %103 = vmatprep.subr.mxu0 0.0
    %104 = vmatpush1.msra.mxu0 0.0
    %105 = vmatprep.subr.mxu0 0.0
    %106 = vmatpush1.msra.mxu0 0.0
    %107 = vmatprep.subr.mxu0 0.0
    %108 = vmatpush1.msra.mxu0 0.0
    %109 = vmatprep.subr.mxu0 0.0
    %110 = vmatpush1.msra.mxu0 0.0
    %111 = vmatprep.subr.mxu0 0.0
    %112 = vmatpush1.msra.mxu0 %v76
    %113 = vmatprep.subr.mxu0 0.0
    %114 = vmatpush2.msra.mxu0 0.0
    %115 = vmatprep.subr.mxu0 0.0
    %116 = vmatpush2.msra.mxu0 0.0
    %117 = vmatprep.subr.mxu0 0.0
    %118 = vmatpush2.msra.mxu0 0.0
    %119 = vmatprep.subr.mxu0 0.0
    %120 = vmatpush2.msra.mxu0 0.0
    %121 = vmatprep.subr.mxu0 0.0
    %122 = vmatpush2.msra.mxu0 0.0
    %123 = vmatprep.subr.mxu0 0.0
    %124 = vmatpush2.msra.mxu0 0.0
    %125 = vmatprep.subr.mxu0 0.0
    %126 = vmatpush2.msra.mxu0 0.0
    %127 = vmatprep.subr.mxu0 0.0
    %128 = vmatpush2.msra.mxu0 0.0
    %129 = vmatprep.subr.mxu0 0.0
    %130 = vmatpush2.msra.mxu0 0.0
    %131 = vmatprep.subr.mxu0 0.0
    %132 = vmatpush2.msra.mxu0 0.0
    %133 = vmatprep.subr.mxu0 0.0
    %134 = vmatpush2.msra.mxu0 0.0
    %135 = vmatprep.subr.mxu0 0.0
    %136 = vmatpush2.msra.mxu0 0.0
    %137 = vmatprep.subr.mxu0 0.0
    %138 = vmatpush2.msra.mxu0 0.0
    %139 = vmatprep.subr.mxu0 0.0
    %140 = vmatpush2.msra.mxu0 0.0
    %141 = vmatprep.subr.mxu0 0.0
    %142 = vmatpush2.msra.mxu0 0.0
    %143 = vmatprep.subr.mxu0 0.0
    %144 = vmatpush2.msra.mxu0 0.0
    %145 = vmatprep.mubr.f32.mxu0 0.0
    %146 = vmatmul.mubr.f32.gmra.mxu0 %v79
    %v147 = vpop.f32.mrf.mxu0
    %v148 = vadd.f32 0.0, %v147
    %v149 = vpop.f32.mrf.mxu0
    %150 = vdwg.mxu0
    %vm151 = vcmask 130048
    %v153 = vsel %vm151, %v72, 0
    %155 = vmatprep.subr.mxu0 0.0
    %156 = vmatpush1.msra.mxu0 0.0
    %157 = vmatprep.subr.mxu0 0.0
    %158 = vmatpush1.msra.mxu0 0.0
    %159 = vmatprep.subr.mxu0 0.0
    %160 = vmatpush1.msra.mxu0 0.0
    %161 = vmatprep.subr.mxu0 0.0
    %162 = vmatpush1.msra.mxu0 0.0
    %163 = vmatprep.subr.mxu0 0.0
    %164 = vmatpush1.msra.mxu0 0.0
    %165 = vmatprep.subr.mxu0 0.0
    %166 = vmatpush1.msra.mxu0 0.0
    %167 = vmatprep.subr.mxu0 0.0
    %168 = vmatpush1.msra.mxu0 0.0
    %169 = vmatprep.subr.mxu0 0.0
    %170 = vmatpush1.msra.mxu0 0.0
    %171 = vmatprep.subr.mxu0 0.0
    %172 = vmatpush1.msra.mxu0 0.0
    %173 = vmatprep.subr.mxu0 0.0
    %174 = vmatpush1.msra.mxu0 0.0
    %175 = vmatprep.subr.mxu0 0.0
    %176 = vmatpush1.msra.mxu0 0.0
    %177 = vmatprep.subr.mxu0 0.0
    %178 = vmatpush1.msra.mxu0 0.0
    %179 = vmatprep.subr.mxu0 0.0
    %180 = vmatpush1.msra.mxu0 0.0
    %181 = vmatprep.subr.mxu0 0.0
    %182 = vmatpush1.msra.mxu0 0.0
    %183 = vmatprep.subr.mxu0 0.0
    %184 = vmatpush1.msra.mxu0 %v74
    %185 = vmatprep.subr.mxu0 0.0
    %186 = vmatpush1.msra.mxu0 %v73
    %187 = vmatprep.subr.mxu0 0.0
    %188 = vmatpush2.msra.mxu0 0.0
    %189 = vmatprep.subr.mxu0 0.0
    %190 = vmatpush2.msra.mxu0 0.0
    %191 = vmatprep.subr.mxu0 0.0
    %192 = vmatpush2.msra.mxu0 0.0
    %193 = vmatprep.subr.mxu0 0.0
    %194 = vmatpush2.msra.mxu0 0.0
    %195 = vmatprep.subr.mxu0 0.0
    %196 = vmatpush2.msra.mxu0 0.0
    %197 = vmatprep.subr.mxu0 0.0
    %198 = vmatpush2.msra.mxu0 0.0
    %199 = vmatprep.subr.mxu0 0.0
    %200 = vmatpush2.msra.mxu0 0.0
    %201 = vmatprep.subr.mxu0 0.0
    %202 = vmatpush2.msra.mxu0 0.0
    %203 = vmatprep.subr.mxu0 0.0
    %204 = vmatpush2.msra.mxu0 0.0
    %205 = vmatprep.subr.mxu0 0.0
    %206 = vmatpush2.msra.mxu0 0.0
    %207 = vmatprep.subr.mxu0 0.0
    %208 = vmatpush2.msra.mxu0 0.0
    %209 = vmatprep.subr.mxu0 0.0
    %210 = vmatpush2.msra.mxu0 0.0
    %211 = vmatprep.subr.mxu0 0.0
    %212 = vmatpush2.msra.mxu0 0.0
    %213 = vmatprep.subr.mxu0 0.0
    %214 = vmatpush2.msra.mxu0 0.0
    %215 = vmatprep.subr.mxu0 0.0
    %216 = vmatpush2.msra.mxu0 0.0
    %217 = vmatprep.subr.mxu0 0.0
    %218 = vmatpush2.msra.mxu0 0.0
    %219 = vmatprep.mubr.f32.mxu0 0.0
    %220 = vmatmul.mubr.f32.gmra.mxu0 %v153
    %v221 = vpop.f32.mrf.mxu0
    %v222 = vadd.f32 %v148, %v221
    %v223 = vpop.f32.mrf.mxu0
    %224 = vdwg.mxu0
    %v225 = vld [vmem:[%s4] sm:$0x1]
    %v227 = vlaneseq
    %v228 = vshrl.u32 %v227, 7
    %v229 = vsub.s32 0, %v228
    %v230 = vrot.slane %v225, %v229
    %v232 = vadd.f32 %v222, %v230
    %v233 = vmax.f32 %v232, 0.0
    %v234 = vld [vmem:[%s5] sm:$0x1]
    %v236 = vlaneseq
    %v237 = vshrl.u32 %v236, 7
    %v238 = vsub.s32 0, %v237
    %v239 = vrot.slane %v234, %v238
    %v241 = vmul.f32 %v233, %v239
    %242 = vadd.xlane.f32.xlu0 %v241
    %v243 = vpop.xlane.xlu0 %242
    %vm244 = vcmask 7168
    %245 = vst.msk [vmem:[%s6] sm:$0xff] %vm244, %v243
    // Predicated region
    $region42: #{tpu_custom_call.1} parent=1 // pred_check
      _
    $region43: #{tpu_custom_call.1} parent=1 // pred_check_branch
      %247 = sbr.rel (0) target = $region45
    $region44: #{tpu_custom_call.1} parent=1 // pred_region
      _
    $region45: #{tpu_custom_call.1} parent=1 // pred_fallthru
      _
    // Predicated region
    $region46: #{tpu_custom_call.1} parent=1 // pred_check
      _
    $region47: #{tpu_custom_call.1} parent=1 // pred_check_branch
      %249 = sbr.rel (0) target = $region49
    $region48: #{tpu_custom_call.1} parent=1 // pred_region
      _
    $region49: #{tpu_custom_call.1} parent=1 // pred_fallthru
      _
    %250 = vsyncpa [#allocation3], 1
    %251 = vsyncpa [#allocation5], 1
    %252 = vsyncpa [#allocation8], 1

</llo_original>
